<compile_context>
chip_gen: v5e
topology: v5e:2x2
jax: 0.10.0
libtpu: 0.0.40
codegen_flags: <defaults>
</compile_context>

<pallas_src>
import functools

import jax
import jax.numpy as jnp
from jax import lax
from jax.experimental import pallas as pl
from jax.experimental.pallas import tpu as pltpu

# ---- static hyperparameters (the `params` object of the module) -------------
X_DIM = 16       # params.x_dim
D_DIM = 32       # params.d_dim
D_LAYERS = 2     # params.d_layers
ACT = "Mish"     # params.act
D_NORM = True    # params.d_norm
D_NORM_TYPE = "layer"  # params.d_norm_type
LN_EPS = 1e-5    # nn.LayerNorm default eps
# TODO(synk): 'batch'/'group' norm variants and spectral_norm weight
# re-normalization are not implemented; forward uses the 'layer' norm branch.


def _mish(v):
    # Mish(x) = x * tanh(softplus(x)) rewritten with a single exp:
    #   s = (1 + e^x)^2  =>  tanh(softplus(x)) = (s - 1) / (s + 1)
    # exp is clamped so s never overflows; for x > 20, Mish(x) == x in f32.
    # The divide is replaced by an approximate EUP reciprocal (single vrcp
    # push that co-issues with the exp stream instead of a Newton divide).
    t = jnp.exp(jnp.minimum(v, 20.0))
    s = (1.0 + t) * (1.0 + t)
    tanh_sp = (s - 1.0) * pl.reciprocal(s + 1.0, approx=True)
    return jnp.where(v > 20.0, v, v * tanh_sp)


def _act(v):
    if ACT == "relu":
        return jnp.maximum(v, 0.0)
    return _mish(v)


def _discriminator_kernel(x_ref, w1_ref, b1_ref, ws_ref, bs_ref,
                          lnw_ref, lnb_ref, w3_ref, b3_ref, o_ref,
                          *, d_layers):
    # x_ref is the natural-layout [TILE_B, X_DIM] block. Weights are in
    # PyTorch [out_features, in_features] layout, so contracting both last
    # dims gives h = W1 @ x^T without any wrapper-side transpose; the MXU
    # absorbs the transposed operand.
    h = lax.dot_general(w1_ref[...], x_ref[...],
                        dimension_numbers=(((1,), (1,)), ((), ())),
                        preferred_element_type=jnp.float32)
    h = _act(h + b1_ref[...])                            # [D_DIM, TILE_B]

    for i in range(d_layers):                            # static unroll
        z = jnp.dot(ws_ref[i], h, preferred_element_type=jnp.float32)
        z = z + bs_ref[i]
        if D_NORM and D_NORM_TYPE != "spectral":
            # Single-pass LayerNorm over the feature (sublane) axis:
            # var = E[z^2] - mu^2  (biased variance, eps inside rsqrt —
            # matches nn.LayerNorm).
            mu = jnp.mean(z, axis=0, keepdims=True)
            ms = jnp.mean(z * z, axis=0, keepdims=True)
            z = (z - mu) * lax.rsqrt(ms - mu * mu + LN_EPS)
            z = z * lnw_ref[i] + lnb_ref[i]
        h = _act(z)

    # map3: [1, D_DIM] @ [D_DIM, TILE_B] -> lane-dense [1, TILE_B] output row.
    o_ref[...] = (jnp.dot(w3_ref[...], h, preferred_element_type=jnp.float32)
                  + b3_ref[...])


def _round_up(n, m):
    return ((n + m - 1) // m) * m


def discriminator_forward(x, params, *, tile_b=8192):
    """x: [B, x_dim] float32. Returns [B, 1] float32 (critic score)."""
    (w1, b1, ws, bs, lnw, lnb, w3, b3) = params
    batch = x.shape[0]

    # Tiling: x is left in its natural [B, X_DIM] HBM layout (no transpose /
    # pad pass). Small batches use a single full-array block; larger batches
    # use 128-aligned tiles with >= 2 grid steps so the "parallel" batch axis
    # can shard across both TensorCores on v7x. A partial final block (batch
    # not a tile multiple) is handled by Pallas' boundary masking; all compute
    # is per-column so padding columns never contaminate valid outputs.
    if batch < 256:
        tile = batch
        grid = (1,)
    else:
        tile = _round_up(min(tile_b, _round_up(pl.cdiv(batch, 2), 128)), 128)
        grid = (pl.cdiv(batch, tile),)

    const2 = lambda i: (0, 0)
    const3 = lambda i: (0, 0, 0)

    kernel = functools.partial(_discriminator_kernel, d_layers=D_LAYERS)

    param_bytes = sum(int(p.size) * p.dtype.itemsize
                      for p in (w1, b1, ws, bs, lnw, lnb, w3, b3))
    cost = pl.CostEstimate(
        flops=2 * batch * (X_DIM * D_DIM + D_LAYERS * D_DIM * D_DIM + D_DIM),
        transcendentals=2 * batch * D_DIM * (1 + D_LAYERS),
        bytes_accessed=batch * (X_DIM + 1) * 4 + param_bytes,
    )

    out_t = pl.pallas_call(
        kernel,
        out_shape=jax.ShapeDtypeStruct((1, batch), jnp.float32),
        grid=grid,
        in_specs=[
            pl.BlockSpec((tile, X_DIM), lambda i: (i, 0)),     # x (tiled, natural)
            pl.BlockSpec((D_DIM, X_DIM), const2),              # w1 (VMEM-resident)
            pl.BlockSpec((D_DIM, 1), const2),                  # b1
            pl.BlockSpec((D_LAYERS, D_DIM, D_DIM), const3),    # ws
            pl.BlockSpec((D_LAYERS, D_DIM, 1), const3),        # bs
            pl.BlockSpec((D_LAYERS, D_DIM, 1), const3),        # lnw
            pl.BlockSpec((D_LAYERS, D_DIM, 1), const3),        # lnb
            pl.BlockSpec((1, D_DIM), const2),                  # w3
            pl.BlockSpec((1, 1), const2),                      # b3
        ],
        out_specs=pl.BlockSpec((1, tile), lambda i: (0, i)),
        compiler_params=pltpu.CompilerParams(
            dimension_semantics=("parallel",),
            vmem_limit_bytes=32 * 1024 * 1024,
        ),
        cost_estimate=cost,
    )(x, w1, b1, ws, bs, lnw, lnb, w3, b3)

    # [1, B] -> [B, 1] is a pure row-major reshape: no data movement.
    return jnp.reshape(out_t, (batch, 1))


def init_params(key):
    """Deterministic parameter init (PyTorch-like uniform fan-in ranges).

    Linear weights are stored in PyTorch layout [out_features, in_features];
    biases / LayerNorm params as column vectors [features, 1] (matching the
    kernel's [features, batch] compute layout).
    """
    ks = jax.random.split(key, 8)

    def lin(kw, kb, fan_in, fan_out):
        bound = 1.0 / jnp.sqrt(float(fan_in))
        w = jax.random.uniform(kw, (fan_out, fan_in), jnp.float32, -bound, bound)
        b = jax.random.uniform(kb, (fan_out, 1), jnp.float32, -bound, bound)
        return w, b

    w1, b1 = lin(ks[0], ks[1], X_DIM, D_DIM)

    ws_list, bs_list = [], []
    kk = jax.random.split(ks[2], 2 * D_LAYERS)
    for i in range(D_LAYERS):
        w, b = lin(kk[2 * i], kk[2 * i + 1], D_DIM, D_DIM)
        ws_list.append(w)
        bs_list.append(b)
    ws = jnp.stack(ws_list)                      # [L, d_dim, d_dim]
    bs = jnp.stack(bs_list)                      # [L, d_dim, 1]

    # nn.LayerNorm default init: weight=1, bias=0
    lnw = jnp.ones((D_LAYERS, D_DIM, 1), jnp.float32)
    lnb = jnp.zeros((D_LAYERS, D_DIM, 1), jnp.float32)

    w3, b3 = lin(ks[3], ks[4], D_DIM, 1)
    return (w1, b1, ws, bs, lnw, lnb, w3, b3)


def _reference_forward(x, params):
    """Plain-JAX reference mirroring the PyTorch forward (natural layout)."""
    (w1, b1, ws, bs, lnw, lnb, w3, b3) = params

    def mish(v):
        return v * jnp.tanh(jax.nn.softplus(v))

    act = (lambda v: jnp.maximum(v, 0.0)) if ACT == "relu" else mish

    h = act(x @ w1.T + b1[:, 0])
    for i in range(D_LAYERS):
        z = h @ ws[i].T + bs[i][:, 0]
        mu = jnp.mean(z, axis=-1, keepdims=True)
        var = jnp.mean(jnp.square(z - mu), axis=-1, keepdims=True)
        z = (z - mu) / jnp.sqrt(var + LN_EPS) * lnw[i][:, 0] + lnb[i][:, 0]
        h = act(z)
    return h @ w3.T + b3[:, 0]


if __name__ == "__main__":
    key = jax.random.PRNGKey(0)
    k_x, k_p = jax.random.split(key)
    params = init_params(k_p)

    # batch=8 exercises the single-block path; batch=512 exercises the
    # multi-tile "parallel" grid (2 x 256).
    for batch in (8, 512):
        kx = jax.random.fold_in(k_x, batch)
        x = jax.random.normal(kx, (batch, X_DIM), jnp.float32)

        out = jax.block_until_ready(discriminator_forward(x, params))
        ref = _reference_forward(x, params)

        assert out.shape == (batch, 1)
        # Slightly looser tolerance than exact f32: Mish uses the approximate
        # EUP reciprocal (~2^-12 relative error).
        assert jnp.allclose(out, ref, atol=5e-3, rtol=5e-3), (
            f"mismatch at batch={batch}: "
            f"max abs err {float(jnp.max(jnp.abs(out - ref)))}")

    print("KERNEL_OK")
</pallas_src>

<mosaic_0001>
module attributes {stable_mosaic.version = 11 : i64} {
  func.func @_discriminator_kernel(%arg0: i32, %arg1: memref<8x16xf32, #tpu.memory_space<vmem>>, %arg2: memref<32x16xf32, #tpu.memory_space<vmem>>, %arg3: memref<32x1xf32, #tpu.memory_space<vmem>>, %arg4: memref<2x32x32xf32, #tpu.memory_space<vmem>>, %arg5: memref<2x32x1xf32, #tpu.memory_space<vmem>>, %arg6: memref<2x32x1xf32, #tpu.memory_space<vmem>>, %arg7: memref<2x32x1xf32, #tpu.memory_space<vmem>>, %arg8: memref<1x32xf32, #tpu.memory_space<vmem>>, %arg9: memref<1x1xf32, #tpu.memory_space<vmem>>, %arg10: memref<1x8xf32, #tpu.memory_space<vmem>>) attributes {dimension_semantics = [#tpu.dimension_semantics<parallel>], iteration_bounds = array<i64: 1>, scalar_prefetch = 0 : i64, scratch_operands = 0 : i64, tpu.core_type = #tpu.core_type<tc>, window_params = [{transform_indices = @transform_0, window_bounds = array<i64: 8, 16>}, {pipeline_mode = #tpu.pipeline_mode<synchronous>, transform_indices = @transform_1, window_bounds = array<i64: 32, 16>}, {pipeline_mode = #tpu.pipeline_mode<synchronous>, transform_indices = @transform_2, window_bounds = array<i64: 32, 1>}, {pipeline_mode = #tpu.pipeline_mode<synchronous>, transform_indices = @transform_3, window_bounds = array<i64: 2, 32, 32>}, {pipeline_mode = #tpu.pipeline_mode<synchronous>, transform_indices = @transform_4, window_bounds = array<i64: 2, 32, 1>}, {pipeline_mode = #tpu.pipeline_mode<synchronous>, transform_indices = @transform_5, window_bounds = array<i64: 2, 32, 1>}, {pipeline_mode = #tpu.pipeline_mode<synchronous>, transform_indices = @transform_6, window_bounds = array<i64: 2, 32, 1>}, {pipeline_mode = #tpu.pipeline_mode<synchronous>, transform_indices = @transform_7, window_bounds = array<i64: 1, 32>}, {pipeline_mode = #tpu.pipeline_mode<synchronous>, transform_indices = @transform_8, window_bounds = array<i64: 1, 1>}, {transform_indices = @transform_9, window_bounds = array<i64: 1, 8>}]} {
    %c0 = arith.constant 0 : index
    %c0_0 = arith.constant 0 : index
    %0 = vector.load %arg2[%c0, %c0_0] : memref<32x16xf32, #tpu.memory_space<vmem>>, vector<32x16xf32>
    %c0_1 = arith.constant 0 : index
    %c0_2 = arith.constant 0 : index
    %1 = vector.load %arg1[%c0_1, %c0_2] : memref<8x16xf32, #tpu.memory_space<vmem>>, vector<8x16xf32>
    %cst = arith.constant dense<0.000000e+00> : vector<32x8xf32>
    %2 = tpu.matmul %0, %1, %cst {dimension_numbers = #tpu.dot_dimension_numbers<[1], [1], [0], [0], [0, 0, 1, 0], [], []>} : vector<32x16xf32>, vector<8x16xf32>, vector<32x8xf32> -> vector<32x8xf32>
    %c0_3 = arith.constant 0 : index
    %c0_4 = arith.constant 0 : index
    %3 = vector.load %arg3[%c0_3, %c0_4] : memref<32x1xf32, #tpu.memory_space<vmem>>, vector<32x1xf32>
    %4 = vector.broadcast %3 : vector<32x1xf32> to vector<32x8xf32>
    %5 = arith.addf %2, %4 : vector<32x8xf32>
    %cst_5 = arith.constant 2.000000e+01 : f32
    %6 = vector.broadcast %cst_5 : f32 to vector<32x8xf32>
    %7 = arith.minimumf %5, %6 : vector<32x8xf32>
    %8 = math.exp %7 : vector<32x8xf32>
    %cst_6 = arith.constant 1.000000e+00 : f32
    %9 = vector.broadcast %cst_6 : f32 to vector<32x8xf32>
    %10 = arith.addf %9, %8 : vector<32x8xf32>
    %cst_7 = arith.constant 1.000000e+00 : f32
    %11 = vector.broadcast %cst_7 : f32 to vector<32x8xf32>
    %12 = arith.addf %11, %8 : vector<32x8xf32>
    %13 = arith.mulf %10, %12 : vector<32x8xf32>
    %cst_8 = arith.constant 1.000000e+00 : f32
    %14 = vector.broadcast %cst_8 : f32 to vector<32x8xf32>
    %15 = arith.subf %13, %14 : vector<32x8xf32>
    %cst_9 = arith.constant 1.000000e+00 : f32
    %16 = vector.broadcast %cst_9 : f32 to vector<32x8xf32>
    %17 = arith.addf %13, %16 : vector<32x8xf32>
    %18 = tpu.reciprocal %17 {approx = true} : vector<32x8xf32> -> vector<32x8xf32>
    %19 = arith.mulf %15, %18 : vector<32x8xf32>
    %cst_10 = arith.constant 2.000000e+01 : f32
    %20 = vector.broadcast %cst_10 : f32 to vector<32x8xf32>
    %21 = arith.cmpf ogt, %5, %20 : vector<32x8xf32>
    %22 = arith.mulf %5, %19 : vector<32x8xf32>
    %23 = arith.select %21, %5, %22 : vector<32x8xi1>, vector<32x8xf32>
    %c0_11 = arith.constant 0 : index
    %c0_12 = arith.constant 0 : index
    %c0_13 = arith.constant 0 : index
    %24 = vector.load %arg4[%c0_11, %c0_12, %c0_13] : memref<2x32x32xf32, #tpu.memory_space<vmem>>, vector<1x32x32xf32>
    %25 = vector.shape_cast %24 : vector<1x32x32xf32> to vector<32x32xf32>
    %cst_14 = arith.constant dense<0.000000e+00> : vector<32x8xf32>
    %26 = tpu.matmul %25, %23, %cst_14 {dimension_numbers = #tpu.dot_dimension_numbers<[1], [0], [0], [1], [0, 0, 1, 1], [], []>} : vector<32x32xf32>, vector<32x8xf32>, vector<32x8xf32> -> vector<32x8xf32>
    %c0_15 = arith.constant 0 : index
    %c0_16 = arith.constant 0 : index
    %c0_17 = arith.constant 0 : index
    %27 = vector.load %arg5[%c0_15, %c0_16, %c0_17] : memref<2x32x1xf32, #tpu.memory_space<vmem>>, vector<1x32x1xf32>
    %28 = vector.shape_cast %27 : vector<1x32x1xf32> to vector<32x1xf32>
    %29 = vector.broadcast %28 : vector<32x1xf32> to vector<32x8xf32>
    %30 = arith.addf %26, %29 : vector<32x8xf32>
    %cst_18 = arith.constant dense<0.000000e+00> : vector<8xf32>
    %31 = vector.multi_reduction <add>, %30, %cst_18 [0] : vector<32x8xf32> to vector<8xf32>
    %32 = vector.shape_cast %31 : vector<8xf32> to vector<1x8xf32>
    %cst_19 = arith.constant 3.200000e+01 : f32
    %33 = vector.broadcast %cst_19 : f32 to vector<1x8xf32>
    %34 = arith.divf %32, %33 : vector<1x8xf32>
    %35 = arith.mulf %30, %30 : vector<32x8xf32>
    %cst_20 = arith.constant dense<0.000000e+00> : vector<8xf32>
    %36 = vector.multi_reduction <add>, %35, %cst_20 [0] : vector<32x8xf32> to vector<8xf32>
    %37 = vector.shape_cast %36 : vector<8xf32> to vector<1x8xf32>
    %cst_21 = arith.constant 3.200000e+01 : f32
    %38 = vector.broadcast %cst_21 : f32 to vector<1x8xf32>
    %39 = arith.divf %37, %38 : vector<1x8xf32>
    %40 = vector.broadcast %34 : vector<1x8xf32> to vector<32x8xf32>
    %41 = arith.subf %30, %40 : vector<32x8xf32>
    %42 = arith.mulf %34, %34 : vector<1x8xf32>
    %43 = arith.subf %39, %42 : vector<1x8xf32>
    %cst_22 = arith.constant 9.99999974E-6 : f32
    %44 = vector.broadcast %cst_22 : f32 to vector<1x8xf32>
    %45 = arith.addf %43, %44 : vector<1x8xf32>
    %46 = math.rsqrt %45 : vector<1x8xf32>
    %47 = vector.broadcast %46 : vector<1x8xf32> to vector<32x8xf32>
    %48 = arith.mulf %41, %47 : vector<32x8xf32>
    %c0_23 = arith.constant 0 : index
    %c0_24 = arith.constant 0 : index
    %c0_25 = arith.constant 0 : index
    %49 = vector.load %arg6[%c0_23, %c0_24, %c0_25] : memref<2x32x1xf32, #tpu.memory_space<vmem>>, vector<1x32x1xf32>
    %50 = vector.shape_cast %49 : vector<1x32x1xf32> to vector<32x1xf32>
    %51 = vector.broadcast %50 : vector<32x1xf32> to vector<32x8xf32>
    %52 = arith.mulf %48, %51 : vector<32x8xf32>
    %c0_26 = arith.constant 0 : index
    %c0_27 = arith.constant 0 : index
    %c0_28 = arith.constant 0 : index
    %53 = vector.load %arg7[%c0_26, %c0_27, %c0_28] : memref<2x32x1xf32, #tpu.memory_space<vmem>>, vector<1x32x1xf32>
    %54 = vector.shape_cast %53 : vector<1x32x1xf32> to vector<32x1xf32>
    %55 = vector.broadcast %54 : vector<32x1xf32> to vector<32x8xf32>
    %56 = arith.addf %52, %55 : vector<32x8xf32>
    %cst_29 = arith.constant 2.000000e+01 : f32
    %57 = vector.broadcast %cst_29 : f32 to vector<32x8xf32>
    %58 = arith.minimumf %56, %57 : vector<32x8xf32>
    %59 = math.exp %58 : vector<32x8xf32>
    %cst_30 = arith.constant 1.000000e+00 : f32
    %60 = vector.broadcast %cst_30 : f32 to vector<32x8xf32>
    %61 = arith.addf %60, %59 : vector<32x8xf32>
    %cst_31 = arith.constant 1.000000e+00 : f32
    %62 = vector.broadcast %cst_31 : f32 to vector<32x8xf32>
    %63 = arith.addf %62, %59 : vector<32x8xf32>
    %64 = arith.mulf %61, %63 : vector<32x8xf32>
    %cst_32 = arith.constant 1.000000e+00 : f32
    %65 = vector.broadcast %cst_32 : f32 to vector<32x8xf32>
    %66 = arith.subf %64, %65 : vector<32x8xf32>
    %cst_33 = arith.constant 1.000000e+00 : f32
    %67 = vector.broadcast %cst_33 : f32 to vector<32x8xf32>
    %68 = arith.addf %64, %67 : vector<32x8xf32>
    %69 = tpu.reciprocal %68 {approx = true} : vector<32x8xf32> -> vector<32x8xf32>
    %70 = arith.mulf %66, %69 : vector<32x8xf32>
    %cst_34 = arith.constant 2.000000e+01 : f32
    %71 = vector.broadcast %cst_34 : f32 to vector<32x8xf32>
    %72 = arith.cmpf ogt, %56, %71 : vector<32x8xf32>
    %73 = arith.mulf %56, %70 : vector<32x8xf32>
    %74 = arith.select %72, %56, %73 : vector<32x8xi1>, vector<32x8xf32>
    %c1 = arith.constant 1 : index
    %c0_35 = arith.constant 0 : index
    %c0_36 = arith.constant 0 : index
    %75 = vector.load %arg4[%c1, %c0_35, %c0_36] : memref<2x32x32xf32, #tpu.memory_space<vmem>>, vector<1x32x32xf32>
    %76 = vector.shape_cast %75 : vector<1x32x32xf32> to vector<32x32xf32>
    %cst_37 = arith.constant dense<0.000000e+00> : vector<32x8xf32>
    %77 = tpu.matmul %76, %74, %cst_37 {dimension_numbers = #tpu.dot_dimension_numbers<[1], [0], [0], [1], [0, 0, 1, 1], [], []>} : vector<32x32xf32>, vector<32x8xf32>, vector<32x8xf32> -> vector<32x8xf32>
    %c1_38 = arith.constant 1 : index
    %c0_39 = arith.constant 0 : index
    %c0_40 = arith.constant 0 : index
    %78 = vector.load %arg5[%c1_38, %c0_39, %c0_40] : memref<2x32x1xf32, #tpu.memory_space<vmem>>, vector<1x32x1xf32>
    %79 = vector.shape_cast %78 : vector<1x32x1xf32> to vector<32x1xf32>
    %80 = vector.broadcast %79 : vector<32x1xf32> to vector<32x8xf32>
    %81 = arith.addf %77, %80 : vector<32x8xf32>
    %cst_41 = arith.constant dense<0.000000e+00> : vector<8xf32>
    %82 = vector.multi_reduction <add>, %81, %cst_41 [0] : vector<32x8xf32> to vector<8xf32>
    %83 = vector.shape_cast %82 : vector<8xf32> to vector<1x8xf32>
    %cst_42 = arith.constant 3.200000e+01 : f32
    %84 = vector.broadcast %cst_42 : f32 to vector<1x8xf32>
    %85 = arith.divf %83, %84 : vector<1x8xf32>
    %86 = arith.mulf %81, %81 : vector<32x8xf32>
    %cst_43 = arith.constant dense<0.000000e+00> : vector<8xf32>
    %87 = vector.multi_reduction <add>, %86, %cst_43 [0] : vector<32x8xf32> to vector<8xf32>
    %88 = vector.shape_cast %87 : vector<8xf32> to vector<1x8xf32>
    %cst_44 = arith.constant 3.200000e+01 : f32
    %89 = vector.broadcast %cst_44 : f32 to vector<1x8xf32>
    %90 = arith.divf %88, %89 : vector<1x8xf32>
    %91 = vector.broadcast %85 : vector<1x8xf32> to vector<32x8xf32>
    %92 = arith.subf %81, %91 : vector<32x8xf32>
    %93 = arith.mulf %85, %85 : vector<1x8xf32>
    %94 = arith.subf %90, %93 : vector<1x8xf32>
    %cst_45 = arith.constant 9.99999974E-6 : f32
    %95 = vector.broadcast %cst_45 : f32 to vector<1x8xf32>
    %96 = arith.addf %94, %95 : vector<1x8xf32>
    %97 = math.rsqrt %96 : vector<1x8xf32>
    %98 = vector.broadcast %97 : vector<1x8xf32> to vector<32x8xf32>
    %99 = arith.mulf %92, %98 : vector<32x8xf32>
    %c1_46 = arith.constant 1 : index
    %c0_47 = arith.constant 0 : index
    %c0_48 = arith.constant 0 : index
    %100 = vector.load %arg6[%c1_46, %c0_47, %c0_48] : memref<2x32x1xf32, #tpu.memory_space<vmem>>, vector<1x32x1xf32>
    %101 = vector.shape_cast %100 : vector<1x32x1xf32> to vector<32x1xf32>
    %102 = vector.broadcast %101 : vector<32x1xf32> to vector<32x8xf32>
    %103 = arith.mulf %99, %102 : vector<32x8xf32>
    %c1_49 = arith.constant 1 : index
    %c0_50 = arith.constant 0 : index
    %c0_51 = arith.constant 0 : index
    %104 = vector.load %arg7[%c1_49, %c0_50, %c0_51] : memref<2x32x1xf32, #tpu.memory_space<vmem>>, vector<1x32x1xf32>
    %105 = vector.shape_cast %104 : vector<1x32x1xf32> to vector<32x1xf32>
    %106 = vector.broadcast %105 : vector<32x1xf32> to vector<32x8xf32>
    %107 = arith.addf %103, %106 : vector<32x8xf32>
    %cst_52 = arith.constant 2.000000e+01 : f32
    %108 = vector.broadcast %cst_52 : f32 to vector<32x8xf32>
    %109 = arith.minimumf %107, %108 : vector<32x8xf32>
    %110 = math.exp %109 : vector<32x8xf32>
    %cst_53 = arith.constant 1.000000e+00 : f32
    %111 = vector.broadcast %cst_53 : f32 to vector<32x8xf32>
    %112 = arith.addf %111, %110 : vector<32x8xf32>
    %cst_54 = arith.constant 1.000000e+00 : f32
    %113 = vector.broadcast %cst_54 : f32 to vector<32x8xf32>
    %114 = arith.addf %113, %110 : vector<32x8xf32>
    %115 = arith.mulf %112, %114 : vector<32x8xf32>
    %cst_55 = arith.constant 1.000000e+00 : f32
    %116 = vector.broadcast %cst_55 : f32 to vector<32x8xf32>
    %117 = arith.subf %115, %116 : vector<32x8xf32>
    %cst_56 = arith.constant 1.000000e+00 : f32
    %118 = vector.broadcast %cst_56 : f32 to vector<32x8xf32>
    %119 = arith.addf %115, %118 : vector<32x8xf32>
    %120 = tpu.reciprocal %119 {approx = true} : vector<32x8xf32> -> vector<32x8xf32>
    %121 = arith.mulf %117, %120 : vector<32x8xf32>
    %cst_57 = arith.constant 2.000000e+01 : f32
    %122 = vector.broadcast %cst_57 : f32 to vector<32x8xf32>
    %123 = arith.cmpf ogt, %107, %122 : vector<32x8xf32>
    %124 = arith.mulf %107, %121 : vector<32x8xf32>
    %125 = arith.select %123, %107, %124 : vector<32x8xi1>, vector<32x8xf32>
    %c0_58 = arith.constant 0 : index
    %c0_59 = arith.constant 0 : index
    %126 = vector.load %arg8[%c0_58, %c0_59] : memref<1x32xf32, #tpu.memory_space<vmem>>, vector<1x32xf32>
    %cst_60 = arith.constant dense<0.000000e+00> : vector<1x8xf32>
    %127 = tpu.matmul %126, %125, %cst_60 {dimension_numbers = #tpu.dot_dimension_numbers<[1], [0], [0], [1], [0, 0, 1, 1], [], []>} : vector<1x32xf32>, vector<32x8xf32>, vector<1x8xf32> -> vector<1x8xf32>
    %c0_61 = arith.constant 0 : index
    %c0_62 = arith.constant 0 : index
    %128 = vector.load %arg9[%c0_61, %c0_62] : memref<1x1xf32, #tpu.memory_space<vmem>>, vector<1x1xf32>
    %129 = vector.broadcast %128 : vector<1x1xf32> to vector<1x8xf32>
    %130 = arith.addf %127, %129 : vector<1x8xf32>
    %c0_63 = arith.constant 0 : index
    %c0_64 = arith.constant 0 : index
    %131 = vector.load %arg10[%c0_63, %c0_64] : memref<1x8xf32, #tpu.memory_space<vmem>>, vector<1x8xf32>
    tpu.vector_store %arg10[%c0_63, %c0_64], %130 {strides = array<i32>} : memref<1x8xf32, #tpu.memory_space<vmem>>, vector<1x8xf32>,
    return
  }
  func.func @transform_0(%arg0: i32) -> (i32, i32) {
    %c0_i32 = arith.constant 0 : i32
    %c0_i32_0 = arith.constant 0 : i32
    return %arg0, %c0_i32 : i32, i32
  }
  func.func @transform_1(%arg0: i32) -> (i32, i32) {
    %c0_i32 = arith.constant 0 : i32
    %c0_i32_0 = arith.constant 0 : i32
    %c0_i32_1 = arith.constant 0 : i32
    return %c0_i32, %c0_i32_0 : i32, i32
  }
  func.func @transform_2(%arg0: i32) -> (i32, i32) {
    %c0_i32 = arith.constant 0 : i32
    %c0_i32_0 = arith.constant 0 : i32
    %c0_i32_1 = arith.constant 0 : i32
    return %c0_i32, %c0_i32_0 : i32, i32
  }
  func.func @transform_3(%arg0: i32) -> (i32, i32, i32) {
    %c0_i32 = arith.constant 0 : i32
    %c0_i32_0 = arith.constant 0 : i32
    %c0_i32_1 = arith.constant 0 : i32
    %c0_i32_2 = arith.constant 0 : i32
    return %c0_i32, %c0_i32_0, %c0_i32_1 : i32, i32, i32
  }
  func.func @transform_4(%arg0: i32) -> (i32, i32, i32) {
    %c0_i32 = arith.constant 0 : i32
    %c0_i32_0 = arith.constant 0 : i32
    %c0_i32_1 = arith.constant 0 : i32
    %c0_i32_2 = arith.constant 0 : i32
    return %c0_i32, %c0_i32_0, %c0_i32_1 : i32, i32, i32
  }
  func.func @transform_5(%arg0: i32) -> (i32, i32, i32) {
    %c0_i32 = arith.constant 0 : i32
    %c0_i32_0 = arith.constant 0 : i32
    %c0_i32_1 = arith.constant 0 : i32
    %c0_i32_2 = arith.constant 0 : i32
    return %c0_i32, %c0_i32_0, %c0_i32_1 : i32, i32, i32
  }
  func.func @transform_6(%arg0: i32) -> (i32, i32, i32) {
    %c0_i32 = arith.constant 0 : i32
    %c0_i32_0 = arith.constant 0 : i32
    %c0_i32_1 = arith.constant 0 : i32
    %c0_i32_2 = arith.constant 0 : i32
    return %c0_i32, %c0_i32_0, %c0_i32_1 : i32, i32, i32
  }
  func.func @transform_7(%arg0: i32) -> (i32, i32) {
    %c0_i32 = arith.constant 0 : i32
    %c0_i32_0 = arith.constant 0 : i32
    %c0_i32_1 = arith.constant 0 : i32
    return %c0_i32, %c0_i32_0 : i32, i32
  }
  func.func @transform_8(%arg0: i32) -> (i32, i32) {
    %c0_i32 = arith.constant 0 : i32
    %c0_i32_0 = arith.constant 0 : i32
    %c0_i32_1 = arith.constant 0 : i32
    return %c0_i32, %c0_i32_0 : i32, i32
  }
  func.func @transform_9(%arg0: i32) -> (i32, i32) {
    %c0_i32 = arith.constant 0 : i32
    %c0_i32_0 = arith.constant 0 : i32
    return %c0_i32, %arg0 : i32, i32
  }
}

</mosaic_0001>

<llo_original>
// kernel: tpu_custom_call.1
$region0: #{tpu_custom_call.1}
  #allocation0 [shape = 'u32[]', space=smem, size = 0x4, offset = 0x4, fixed_abs, tag = 'smem constant byte address 0x4 - core index']
  #allocation1 [shape = 'u32[72,128]{1,0:T(1,128)}', space=vmem, size = 0x9000, scoped, tag = 'internal scratch']
  #allocation2 [shape = 'f32[1,1]{1,0:T(1,128)S(1)}', space=vmem, size = 0x200, scoped, tag = 'scoped memory for tpu_custom_call.1']
  %s0 = inlined_call_operand.vmem [shape: f32[8,16], index: 0, kind: input, shape index: {}]
  %s1 = inlined_call_operand.vmem [shape: f32[32,16], index: 1, kind: input, shape index: {}]
  %s2 = inlined_call_operand.vmem [shape: f32[32,1], index: 2, kind: input, shape index: {}]
  %s3 = inlined_call_operand.vmem [shape: f32[2,32,32], index: 3, kind: input, shape index: {}]
  %s4 = inlined_call_operand.vmem [shape: f32[2,32,1], index: 4, kind: input, shape index: {}]
  %s5 = inlined_call_operand.vmem [shape: f32[2,32,1], index: 5, kind: input, shape index: {}]
  %s6 = inlined_call_operand.vmem [shape: f32[2,32,1], index: 6, kind: input, shape index: {}]
  %s7 = inlined_call_operand.vmem [shape: f32[1,32], index: 7, kind: input, shape index: {}]
  %s8 = inlined_call_operand.<no memory space> [shape: f32[1,1], index: 8, kind: input, shape index: {}]
  %s9 = inlined_call_operand.hbm [shape: f32[1,8], index: 9, kind: output, shape index: {}]
  %s10 = sld [smem:[#allocation0]]
  $region46: #{tpu_custom_call.1} parent=0
    _
  %s12 = ssub.s32 1, %s10
  %s13 = scalar_select 0, %s12, %s10
  %v14 = vstv %s8
  %15 = vst [vmem:[#allocation2] sm:$0x1] %v14
  $region1: #{tpu_custom_call.1} parent=0
    #allocation3 [shape = 'u8[512]{0}', space=vmem, size = 0x400, scoped, tag = 'output window, operand 0, single buffered']
    #allocation4 [shape = 's32[1]{0}', space=sflag, size = 0x4, scoped, tag = 'scoped memory for tpu_custom_call.1']
    %16 = vsyncpa [#allocation4], 0
    // Predicated region
    $region2: #{tpu_custom_call.1} parent=1 // pred_check
      _
    $region3: #{tpu_custom_call.1} parent=1 // pred_check_branch
      %18 = sbr.rel (0) target = $region5
    $region4: #{tpu_custom_call.1} parent=1 // pred_region
      _
    $region5: #{tpu_custom_call.1} parent=1 // pred_fallthru
      _
    // Predicated region
    $region6: #{tpu_custom_call.1} parent=1 // pred_check
      _
    $region7: #{tpu_custom_call.1} parent=1 // pred_check_branch
      %20 = sbr.rel (0) target = $region9
    $region8: #{tpu_custom_call.1} parent=1 // pred_region
      _
    $region9: #{tpu_custom_call.1} parent=1 // pred_fallthru
      _
    // Predicated region
    $region10: #{tpu_custom_call.1} parent=1 // pred_check
      _
    $region11: #{tpu_custom_call.1} parent=1 // pred_check_branch
      %22 = sbr.rel (0) target = $region13
    $region12: #{tpu_custom_call.1} parent=1 // pred_region
      _
    $region13: #{tpu_custom_call.1} parent=1 // pred_fallthru
      _
    // Predicated region
    $region14: #{tpu_custom_call.1} parent=1 // pred_check
      _
    $region15: #{tpu_custom_call.1} parent=1 // pred_check_branch
      %24 = sbr.rel (0) target = $region17
    $region16: #{tpu_custom_call.1} parent=1 // pred_region
      _
    $region17: #{tpu_custom_call.1} parent=1 // pred_fallthru
      _
    // Predicated region
    $region18: #{tpu_custom_call.1} parent=1 // pred_check
      _
    $region19: #{tpu_custom_call.1} parent=1 // pred_check_branch
      %26 = sbr.rel (0) target = $region21
    $region20: #{tpu_custom_call.1} parent=1 // pred_region
      _
    $region21: #{tpu_custom_call.1} parent=1 // pred_fallthru
      _
    // Predicated region
    $region22: #{tpu_custom_call.1} parent=1 // pred_check
      _
    $region23: #{tpu_custom_call.1} parent=1 // pred_check_branch
      %28 = sbr.rel (0) target = $region25
    $region24: #{tpu_custom_call.1} parent=1 // pred_region
      _
    $region25: #{tpu_custom_call.1} parent=1 // pred_fallthru
      _
    // Predicated region
    $region26: #{tpu_custom_call.1} parent=1 // pred_check
      _
    $region27: #{tpu_custom_call.1} parent=1 // pred_check_branch
      %30 = sbr.rel (0) target = $region29
    $region28: #{tpu_custom_call.1} parent=1 // pred_region
      _
    $region29: #{tpu_custom_call.1} parent=1 // pred_fallthru
      _
    // Predicated region
    $region30: #{tpu_custom_call.1} parent=1 // pred_check
      _
    $region31: #{tpu_custom_call.1} parent=1 // pred_check_branch
      %32 = sbr.rel (0) target = $region33
    $region32: #{tpu_custom_call.1} parent=1 // pred_region
      _
    $region33: #{tpu_custom_call.1} parent=1 // pred_fallthru
      _
    // Predicated region
    $region34: #{tpu_custom_call.1} parent=1 // pred_check
      _
    $region35: #{tpu_custom_call.1} parent=1 // pred_check_branch
      %34 = sbr.rel (0) target = $region37
    $region36: #{tpu_custom_call.1} parent=1 // pred_region
      _
    $region37: #{tpu_custom_call.1} parent=1 // pred_fallthru
      _
    %v35 = vld [vmem:[%s1] sm:$0xff]
    %v36 = vld [vmem:[%s1 + $0x8] sm:$0xff]
    %v37 = vld [vmem:[%s1 + $0x10] sm:$0xff]
    %v38 = vld [vmem:[%s1 + $0x18] sm:$0xff]
    %v39 = vld [vmem:[%s0] sm:$0xff]
    %v40 = vld [vmem:[%s2] sm:$0xff]
    %v41 = vld [vmem:[%s2 + $0x8] sm:$0xff]
    %v42 = vld [vmem:[%s2 + $0x10] sm:$0xff]
    %v43 = vld [vmem:[%s2 + $0x18] sm:$0xff]
    %45 = vset.pattern.permute.xlu0 0
    %46 = vperm.xlu0 %45, %v40
    %v47 = vpop.permute.xlu0 %46
    %50 = vset.pattern.permute.xlu0 0
    %51 = vperm.xlu0 %50, %v41
    %v52 = vpop.permute.xlu0 %51
    %55 = vset.pattern.permute.xlu0 0
    %56 = vperm.xlu0 %55, %v42
    %v57 = vpop.permute.xlu0 %56
    %60 = vset.pattern.permute.xlu0 0
    %61 = vperm.xlu0 %60, %v43
    %v62 = vpop.permute.xlu0 %61
    %vm64 = vcmask 130048
    %v66 = vsel %vm64, %v35, 0
    %v69 = vsel %vm64, %v36, 0
    %v72 = vsel %vm64, %v37, 0
    %v75 = vsel %vm64, %v38, 0
    %v78 = vsel %vm64, %v39, 0
    %80 = vmatpush.xpose.msra.mxu0 0.0
    %81 = vmatpush.xpose.msra.mxu0 0.0
    %82 = vmatpush.xpose.msra.mxu0 0.0
    %83 = vmatpush.xpose.msra.mxu0 0.0
    %84 = vmatpush.xpose.msra.mxu0 0.0
    %85 = vmatpush.xpose.msra.mxu0 0.0
    %86 = vmatpush.xpose.msra.mxu0 0.0
    %87 = vmatpush.xpose.msra.mxu0 0.0
    %88 = vmatpush.xpose.msra.mxu0 0.0
    %89 = vmatpush.xpose.msra.mxu0 0.0
    %90 = vmatpush.xpose.msra.mxu0 0.0
    %91 = vmatpush.xpose.msra.mxu0 0.0
    %92 = vmatpush.xpose.msra.mxu0 0.0
    %93 = vmatpush.xpose.msra.mxu0 0.0
    %94 = vmatpush.xpose.msra.mxu0 0.0
    %95 = vmatpush.xpose.msra.mxu0 %v78
    %96 = vmatmul.f32.gmra.mxu0 %v66
    %v97 = vpop.f32.mrf.mxu0
    %v98 = vadd.f32 %v47, %v97
    %99 = vmatmul.f32.gmra.mxu0 %v69
    %v100 = vpop.f32.mrf.mxu0
    %v101 = vadd.f32 %v52, %v100
    %102 = vmatmul.f32.gmra.mxu0 %v72
    %v103 = vpop.f32.mrf.mxu0
    %v104 = vadd.f32 %v57, %v103
    %105 = vmatmul.f32.gmra.mxu0 %v75
    %v106 = vpop.f32.mrf.mxu0
    %v107 = vadd.f32 %v62, %v106
    %108 = vdwg.mxu0
    %v109 = vmin.f32 %v98, 20.0
    %v110 = vmin.f32 %v101, 20.0
    %v111 = vmin.f32 %v104, 20.0
    %v112 = vmin.f32 %v107, 20.0
    %v113 = vmul.f32 %v109, 1.442695
    %v114 = vpow.pop %v113
    %v115 = vmul.f32 %v110, 1.442695
    %v116 = vpow.pop %v115
    %v117 = vmul.f32 %v111, 1.442695
    %v118 = vpow.pop %v117
    %v119 = vmul.f32 %v112, 1.442695
    %v120 = vpow.pop %v119
    %v121 = vadd.f32 %v114, 1.0
    %v122 = vadd.f32 %v116, 1.0
    %v123 = vadd.f32 %v118, 1.0
    %v124 = vadd.f32 %v120, 1.0
    %v125 = vmul.f32 %v121, %v121
    %v126 = vmul.f32 %v122, %v122
    %v127 = vmul.f32 %v123, %v123
    %v128 = vmul.f32 %v124, %v124
    %v129 = vsub.f32 %v125, 1.0
    %v130 = vsub.f32 %v126, 1.0
    %v131 = vsub.f32 %v127, 1.0
    %v132 = vsub.f32 %v128, 1.0
    %v133 = vadd.f32 %v125, 1.0
    %v134 = vadd.f32 %v126, 1.0
    %v135 = vadd.f32 %v127, 1.0
    %v136 = vadd.f32 %v128, 1.0
    %v137 = vrcp.pop %v133
    %v138 = vrcp.pop %v134
    %v139 = vrcp.pop %v135
    %v140 = vrcp.pop %v136
    %v141 = vmul.f32 %v129, %v137
    %v142 = vmul.f32 %v130, %v138
    %v143 = vmul.f32 %v131, %v139
    %v144 = vmul.f32 %v132, %v140
    %vm145 = vcmp.gt.f32.partialorder %v98, 20.0
    %vm146 = vcmp.gt.f32.partialorder %v101, 20.0
    %vm147 = vcmp.gt.f32.partialorder %v104, 20.0
    %vm148 = vcmp.gt.f32.partialorder %v107, 20.0
    %v149 = vmul.f32 %v98, %v141
    %v150 = vmul.f32 %v101, %v142
    %v151 = vmul.f32 %v104, %v143
    %v152 = vmul.f32 %v107, %v144
    %v153 = vsel %vm145, %v98, %v149
    %v154 = vsel %vm146, %v101, %v150
    %v155 = vsel %vm147, %v104, %v151
    %v156 = vsel %vm148, %v107, %v152
    %v157 = vld [vmem:[%s3] sm:$0xff]
    %v158 = vld [vmem:[%s3 + $0x8] sm:$0xff]
    %v159 = vld [vmem:[%s3 + $0x10] sm:$0xff]
    %v160 = vld [vmem:[%s3 + $0x18] sm:$0xff]
    %v161 = vld [vmem:[%s4] sm:$0xff]
    %v162 = vld [vmem:[%s4 + $0x8] sm:$0xff]
    %v163 = vld [vmem:[%s4 + $0x10] sm:$0xff]
    %v164 = vld [vmem:[%s4 + $0x18] sm:$0xff]
    %166 = vset.pattern.permute.xlu0 0
    %167 = vperm.xlu0 %166, %v161
    %v168 = vpop.permute.xlu0 %167
    %171 = vset.pattern.permute.xlu0 0
    %172 = vperm.xlu0 %171, %v162
    %v173 = vpop.permute.xlu0 %172
    %176 = vset.pattern.permute.xlu0 0
    %177 = vperm.xlu0 %176, %v163
    %v178 = vpop.permute.xlu0 %177
    %181 = vset.pattern.permute.xlu0 0
    %182 = vperm.xlu0 %181, %v164
    %v183 = vpop.permute.xlu0 %182
    %vm185 = vcmask 261120
    %v187 = vsel %vm185, %v157, 0
    %v190 = vsel %vm185, %v158, 0
    %v193 = vsel %vm185, %v159, 0
    %v196 = vsel %vm185, %v160, 0
    %198 = vmatpush.msra.mxu0 0.0
    %199 = vmatpush.msra.mxu0 0.0
    %200 = vmatpush.msra.mxu0 0.0
    %201 = vmatpush.msra.mxu0 0.0
    %202 = vmatpush.msra.mxu0 0.0
    %203 = vmatpush.msra.mxu0 0.0
    %204 = vmatpush.msra.mxu0 0.0
    %205 = vmatpush.msra.mxu0 0.0
    %206 = vmatpush.msra.mxu0 0.0
    %207 = vmatpush.msra.mxu0 0.0
    %208 = vmatpush.msra.mxu0 0.0
    %209 = vmatpush.msra.mxu0 0.0
    %210 = vmatpush.msra.mxu0 %v156
    %211 = vmatpush.msra.mxu0 %v155
    %212 = vmatpush.msra.mxu0 %v154
    %213 = vmatpush.msra.mxu0 %v153
    %214 = vmatmul.f32.gmra.mxu0 %v187
    %v215 = vpop.f32.mrf.mxu0
    %v216 = vadd.f32 %v168, %v215
    %217 = vmatmul.f32.gmra.mxu0 %v190
    %v218 = vpop.f32.mrf.mxu0
    %v219 = vadd.f32 %v173, %v218
    %220 = vmatmul.f32.gmra.mxu0 %v193
    %v221 = vpop.f32.mrf.mxu0
    %v222 = vadd.f32 %v178, %v221
    %223 = vmatmul.f32.gmra.mxu0 %v196
    %v224 = vpop.f32.mrf.mxu0
    %v225 = vadd.f32 %v183, %v224
    %226 = vdwg.mxu0
    %vm227 = vcmask 64512
    %v228 = vsel %vm227, %v216, 0.0
    %v229 = vsel %vm227, %v219, 0.0
    %v230 = vadd.f32 %v228, %v229
    %v231 = vsel %vm227, %v222, 0.0
    %v232 = vadd.f32 %v230, %v231
    %v233 = vsel %vm227, %v225, 0.0
    %v234 = vadd.f32 %v232, %v233
    %v235 = vrot.slane %v234, 4
    %v236 = vadd.f32 %v234, %v235
    %v237 = vrot.slane %v236, 2
    %v238 = vadd.f32 %v236, %v237
    %v239 = vrot.slane %v238, 1
    %v240 = vadd.f32 %v238, %v239
    %v241 = vrcp.pop 32.0
    %v242 = vmul.f32 32.0, %v241
    %v243 = vsub.f32 1.0, %v242
    %v244 = vmul.f32 %v241, %v243
    %v245 = vadd.f32 %v241, %v244
    %vm246 = vweird.f32 %v241
    %v247 = vsel %vm246, %v241, %v245
    %v248 = vmul.f32 %v240, %v247
    %v249 = vmul.f32 %v216, %v216
    %v250 = vmul.f32 %v219, %v219
    %v251 = vmul.f32 %v222, %v222
    %v252 = vmul.f32 %v225, %v225
    %v253 = vsel %vm227, %v249, 0.0
    %v254 = vsel %vm227, %v250, 0.0
    %v255 = vadd.f32 %v253, %v254
    %v256 = vsel %vm227, %v251, 0.0
    %v257 = vadd.f32 %v255, %v256
    %v258 = vsel %vm227, %v252, 0.0
    %v259 = vadd.f32 %v257, %v258
    %v260 = vrot.slane %v259, 4
    %v261 = vadd.f32 %v259, %v260
    %v262 = vrot.slane %v261, 2
    %v263 = vadd.f32 %v261, %v262
    %v264 = vrot.slane %v263, 1
    %v265 = vadd.f32 %v263, %v264
    %v266 = vmul.f32 %v265, %v247
    %v267 = vsub.f32 %v216, %v248
    %v268 = vsub.f32 %v219, %v248
    %v269 = vsub.f32 %v222, %v248
    %v270 = vsub.f32 %v225, %v248
    %v271 = vmul.f32 %v248, %v248
    %v272 = vsub.f32 %v266, %v271
    %v273 = vadd.f32 %v272, 1e-05
    %v274 = vrsqrt.pop %v273
    %v275 = vmul.f32 %v274, %v273
    %v276 = vmul.f32 %v275, %v274
    %v277 = vmul.f32 0.5, %v276
    %v278 = vsub.f32 1.5, %v277
    %v279 = vmul.f32 %v274, %v278
    %vm280 = vweird.f32 %v273
    %vm281 = vweird.f32 %v274
    %vm282 = vmor %vm280, %vm281
    %v283 = vsel %vm282, %v274, %v279
    %v284 = vmul.f32 %v267, %v283
    %v285 = vmul.f32 %v268, %v283
    %v286 = vmul.f32 %v269, %v283
    %v287 = vmul.f32 %v270, %v283
    %v288 = vld [vmem:[%s5] sm:$0xff]
    %v289 = vld [vmem:[%s5 + $0x8] sm:$0xff]
    %v290 = vld [vmem:[%s5 + $0x10] sm:$0xff]
    %v291 = vld [vmem:[%s5 + $0x18] sm:$0xff]
    %293 = vset.pattern.permute.xlu0 0
    %294 = vperm.xlu0 %293, %v288
    %v295 = vpop.permute.xlu0 %294
    %298 = vset.pattern.permute.xlu0 0
    %299 = vperm.xlu0 %298, %v289
    %v300 = vpop.permute.xlu0 %299
    %303 = vset.pattern.permute.xlu0 0
    %304 = vperm.xlu0 %303, %v290
    %v305 = vpop.permute.xlu0 %304
    %308 = vset.pattern.permute.xlu0 0
    %309 = vperm.xlu0 %308, %v291
    %v310 = vpop.permute.xlu0 %309
    %v312 = vmul.f32 %v284, %v295
    %v313 = vmul.f32 %v285, %v300
    %v314 = vmul.f32 %v286, %v305
    %v315 = vmul.f32 %v287, %v310
    %v316 = vld [vmem:[%s6] sm:$0xff]
    %v317 = vld [vmem:[%s6 + $0x8] sm:$0xff]
    %v318 = vld [vmem:[%s6 + $0x10] sm:$0xff]
    %v319 = vld [vmem:[%s6 + $0x18] sm:$0xff]
    %321 = vset.pattern.permute.xlu0 0
    %322 = vperm.xlu0 %321, %v316
    %v323 = vpop.permute.xlu0 %322
    %326 = vset.pattern.permute.xlu0 0
    %327 = vperm.xlu0 %326, %v317
    %v328 = vpop.permute.xlu0 %327
    %331 = vset.pattern.permute.xlu0 0
    %332 = vperm.xlu0 %331, %v318
    %v333 = vpop.permute.xlu0 %332
    %336 = vset.pattern.permute.xlu0 0
    %337 = vperm.xlu0 %336, %v319
    %v338 = vpop.permute.xlu0 %337
    %v340 = vadd.f32 %v312, %v323
    %v341 = vadd.f32 %v313, %v328
    %v342 = vadd.f32 %v314, %v333
    %v343 = vadd.f32 %v315, %v338
    %v344 = vmin.f32 %v340, 20.0
    %v345 = vmin.f32 %v341, 20.0
    %v346 = vmin.f32 %v342, 20.0
    %v347 = vmin.f32 %v343, 20.0
    %v348 = vmul.f32 %v344, 1.442695
    %v349 = vpow.pop %v348
    %v350 = vmul.f32 %v345, 1.442695
    %v351 = vpow.pop %v350
    %v352 = vmul.f32 %v346, 1.442695
    %v353 = vpow.pop %v352
    %v354 = vmul.f32 %v347, 1.442695
    %v355 = vpow.pop %v354
    %v356 = vadd.f32 %v349, 1.0
    %v357 = vadd.f32 %v351, 1.0
    %v358 = vadd.f32 %v353, 1.0
    %v359 = vadd.f32 %v355, 1.0
    %v360 = vmul.f32 %v356, %v356
    %v361 = vmul.f32 %v357, %v357
    %v362 = vmul.f32 %v358, %v358
    %v363 = vmul.f32 %v359, %v359
    %v364 = vsub.f32 %v360, 1.0
    %v365 = vsub.f32 %v361, 1.0
    %v366 = vsub.f32 %v362, 1.0
    %v367 = vsub.f32 %v363, 1.0
    %v368 = vadd.f32 %v360, 1.0
    %v369 = vadd.f32 %v361, 1.0
    %v370 = vadd.f32 %v362, 1.0
    %v371 = vadd.f32 %v363, 1.0
    %v372 = vrcp.pop %v368
    %v373 = vrcp.pop %v369
    %v374 = vrcp.pop %v370
    %v375 = vrcp.pop %v371
    %v376 = vmul.f32 %v364, %v372
    %v377 = vmul.f32 %v365, %v373
    %v378 = vmul.f32 %v366, %v374
    %v379 = vmul.f32 %v367, %v375
    %vm380 = vcmp.gt.f32.partialorder %v340, 20.0
    %vm381 = vcmp.gt.f32.partialorder %v341, 20.0
    %vm382 = vcmp.gt.f32.partialorder %v342, 20.0
    %vm383 = vcmp.gt.f32.partialorder %v343, 20.0
    %v384 = vmul.f32 %v340, %v376
    %v385 = vmul.f32 %v341, %v377
    %v386 = vmul.f32 %v342, %v378
    %v387 = vmul.f32 %v343, %v379
    %v388 = vsel %vm380, %v340, %v384
    %v389 = vsel %vm381, %v341, %v385
    %v390 = vsel %vm382, %v342, %v386
    %v391 = vsel %vm383, %v343, %v387
    %s392 = scalar_lea.vmem %s3, 32
    %v393 = vld [vmem:[%s392] sm:$0xff]
    %v394 = vld [vmem:[%s392 + $0x8] sm:$0xff]
    %v395 = vld [vmem:[%s392 + $0x10] sm:$0xff]
    %v396 = vld [vmem:[%s392 + $0x18] sm:$0xff]
    %s397 = scalar_lea.vmem %s4, 32
    %v398 = vld [vmem:[%s397] sm:$0xff]
    %v399 = vld [vmem:[%s397 + $0x8] sm:$0xff]
    %v400 = vld [vmem:[%s397 + $0x10] sm:$0xff]
    %v401 = vld [vmem:[%s397 + $0x18] sm:$0xff]
    %403 = vset.pattern.permute.xlu0 0
    %404 = vperm.xlu0 %403, %v398
    %v405 = vpop.permute.xlu0 %404
    %408 = vset.pattern.permute.xlu0 0
    %409 = vperm.xlu0 %408, %v399
    %v410 = vpop.permute.xlu0 %409
    %413 = vset.pattern.permute.xlu0 0
    %414 = vperm.xlu0 %413, %v400
    %v415 = vpop.permute.xlu0 %414
    %418 = vset.pattern.permute.xlu0 0
    %419 = vperm.xlu0 %418, %v401
    %v420 = vpop.permute.xlu0 %419
    %v423 = vsel %vm185, %v393, 0
    %v426 = vsel %vm185, %v394, 0
    %v429 = vsel %vm185, %v395, 0
    %v432 = vsel %vm185, %v396, 0
    %434 = vmatpush.msra.mxu0 0.0
    %435 = vmatpush.msra.mxu0 0.0
    %436 = vmatpush.msra.mxu0 0.0
    %437 = vmatpush.msra.mxu0 0.0
    %438 = vmatpush.msra.mxu0 0.0
    %439 = vmatpush.msra.mxu0 0.0
    %440 = vmatpush.msra.mxu0 0.0
    %441 = vmatpush.msra.mxu0 0.0
    %442 = vmatpush.msra.mxu0 0.0
    %443 = vmatpush.msra.mxu0 0.0
    %444 = vmatpush.msra.mxu0 0.0
    %445 = vmatpush.msra.mxu0 0.0
    %446 = vmatpush.msra.mxu0 %v391
    %447 = vmatpush.msra.mxu0 %v390
    %448 = vmatpush.msra.mxu0 %v389
    %449 = vmatpush.msra.mxu0 %v388
    %450 = vmatmul.f32.gmra.mxu0 %v423
    %v451 = vpop.f32.mrf.mxu0
    %v452 = vadd.f32 %v405, %v451
    %453 = vmatmul.f32.gmra.mxu0 %v426
    %v454 = vpop.f32.mrf.mxu0
    %v455 = vadd.f32 %v410, %v454
    %456 = vmatmul.f32.gmra.mxu0 %v429
    %v457 = vpop.f32.mrf.mxu0
    %v458 = vadd.f32 %v415, %v457
    %459 = vmatmul.f32.gmra.mxu0 %v432
    %v460 = vpop.f32.mrf.mxu0
    %v461 = vadd.f32 %v420, %v460
    %462 = vdwg.mxu0
    %v463 = vsel %vm227, %v452, 0.0
    %v464 = vsel %vm227, %v455, 0.0
    %v465 = vadd.f32 %v463, %v464
    %v466 = vsel %vm227, %v458, 0.0
    %v467 = vadd.f32 %v465, %v466
    %v468 = vsel %vm227, %v461, 0.0
    %v469 = vadd.f32 %v467, %v468
    %v470 = vrot.slane %v469, 4
    %v471 = vadd.f32 %v469, %v470
    %v472 = vrot.slane %v471, 2
    %v473 = vadd.f32 %v471, %v472
    %v474 = vrot.slane %v473, 1
    %v475 = vadd.f32 %v473, %v474
    %v476 = vmul.f32 %v475, %v247
    %v477 = vmul.f32 %v452, %v452
    %v478 = vmul.f32 %v455, %v455
    %v479 = vmul.f32 %v458, %v458
    %v480 = vmul.f32 %v461, %v461
    %v481 = vsel %vm227, %v477, 0.0
    %v482 = vsel %vm227, %v478, 0.0
    %v483 = vadd.f32 %v481, %v482
    %v484 = vsel %vm227, %v479, 0.0
    %v485 = vadd.f32 %v483, %v484
    %v486 = vsel %vm227, %v480, 0.0
    %v487 = vadd.f32 %v485, %v486
    %v488 = vrot.slane %v487, 4
    %v489 = vadd.f32 %v487, %v488
    %v490 = vrot.slane %v489, 2
    %v491 = vadd.f32 %v489, %v490
    %v492 = vrot.slane %v491, 1
    %v493 = vadd.f32 %v491, %v492
    %v494 = vmul.f32 %v493, %v247
    %v495 = vsub.f32 %v452, %v476
    %v496 = vsub.f32 %v455, %v476
    %v497 = vsub.f32 %v458, %v476
    %v498 = vsub.f32 %v461, %v476
    %v499 = vmul.f32 %v476, %v476
    %v500 = vsub.f32 %v494, %v499
    %v501 = vadd.f32 %v500, 1e-05
    %v502 = vrsqrt.pop %v501
    %v503 = vmul.f32 %v502, %v501
    %v504 = vmul.f32 %v503, %v502
    %v505 = vmul.f32 0.5, %v504
    %v506 = vsub.f32 1.5, %v505
    %v507 = vmul.f32 %v502, %v506
    %vm508 = vweird.f32 %v501
    %vm509 = vweird.f32 %v502
    %vm510 = vmor %vm508, %vm509
    %v511 = vsel %vm510, %v502, %v507
    %v512 = vmul.f32 %v495, %v511
    %v513 = vmul.f32 %v496, %v511
    %v514 = vmul.f32 %v497, %v511
    %v515 = vmul.f32 %v498, %v511
    %s516 = scalar_lea.vmem %s5, 32
    %v517 = vld [vmem:[%s516] sm:$0xff]
    %v518 = vld [vmem:[%s516 + $0x8] sm:$0xff]
    %v519 = vld [vmem:[%s516 + $0x10] sm:$0xff]
    %v520 = vld [vmem:[%s516 + $0x18] sm:$0xff]
    %522 = vset.pattern.permute.xlu0 0
    %523 = vperm.xlu0 %522, %v517
    %v524 = vpop.permute.xlu0 %523
    %527 = vset.pattern.permute.xlu0 0
    %528 = vperm.xlu0 %527, %v518
    %v529 = vpop.permute.xlu0 %528
    %532 = vset.pattern.permute.xlu0 0
    %533 = vperm.xlu0 %532, %v519
    %v534 = vpop.permute.xlu0 %533
    %537 = vset.pattern.permute.xlu0 0
    %538 = vperm.xlu0 %537, %v520
    %v539 = vpop.permute.xlu0 %538
    %v541 = vmul.f32 %v512, %v524
    %v542 = vmul.f32 %v513, %v529
    %v543 = vmul.f32 %v514, %v534
    %v544 = vmul.f32 %v515, %v539
    %s545 = scalar_lea.vmem %s6, 32
    %v546 = vld [vmem:[%s545] sm:$0xff]
    %v547 = vld [vmem:[%s545 + $0x8] sm:$0xff]
    %v548 = vld [vmem:[%s545 + $0x10] sm:$0xff]
    %v549 = vld [vmem:[%s545 + $0x18] sm:$0xff]
    %551 = vset.pattern.permute.xlu0 0
    %552 = vperm.xlu0 %551, %v546
    %v553 = vpop.permute.xlu0 %552
    %556 = vset.pattern.permute.xlu0 0
    %557 = vperm.xlu0 %556, %v547
    %v558 = vpop.permute.xlu0 %557
    %561 = vset.pattern.permute.xlu0 0
    %562 = vperm.xlu0 %561, %v548
    %v563 = vpop.permute.xlu0 %562
    %566 = vset.pattern.permute.xlu0 0
    %567 = vperm.xlu0 %566, %v549
    %v568 = vpop.permute.xlu0 %567
    %v570 = vadd.f32 %v541, %v553
    %v571 = vadd.f32 %v542, %v558
    %v572 = vadd.f32 %v543, %v563
    %v573 = vadd.f32 %v544, %v568
    %v574 = vmin.f32 %v570, 20.0
    %v575 = vmin.f32 %v571, 20.0
    %v576 = vmin.f32 %v572, 20.0
    %v577 = vmin.f32 %v573, 20.0
    %v578 = vmul.f32 %v574, 1.442695
    %v579 = vpow.pop %v578
    %v580 = vmul.f32 %v575, 1.442695
    %v581 = vpow.pop %v580
    %v582 = vmul.f32 %v576, 1.442695
    %v583 = vpow.pop %v582
    %v584 = vmul.f32 %v577, 1.442695
    %v585 = vpow.pop %v584
    %v586 = vadd.f32 %v579, 1.0
    %v587 = vadd.f32 %v581, 1.0
    %v588 = vadd.f32 %v583, 1.0
    %v589 = vadd.f32 %v585, 1.0
    %v590 = vmul.f32 %v586, %v586
    %v591 = vmul.f32 %v587, %v587
    %v592 = vmul.f32 %v588, %v588
    %v593 = vmul.f32 %v589, %v589
    %v594 = vsub.f32 %v590, 1.0
    %v595 = vsub.f32 %v591, 1.0
    %v596 = vsub.f32 %v592, 1.0
    %v597 = vsub.f32 %v593, 1.0
    %v598 = vadd.f32 %v590, 1.0
    %v599 = vadd.f32 %v591, 1.0
    %v600 = vadd.f32 %v592, 1.0
    %v601 = vadd.f32 %v593, 1.0
    %v602 = vrcp.pop %v598
    %v603 = vrcp.pop %v599
    %v604 = vrcp.pop %v600
    %v605 = vrcp.pop %v601
    %v606 = vmul.f32 %v594, %v602
    %v607 = vmul.f32 %v595, %v603
    %v608 = vmul.f32 %v596, %v604
    %v609 = vmul.f32 %v597, %v605
    %vm610 = vcmp.gt.f32.partialorder %v570, 20.0
    %vm611 = vcmp.gt.f32.partialorder %v571, 20.0
    %vm612 = vcmp.gt.f32.partialorder %v572, 20.0
    %vm613 = vcmp.gt.f32.partialorder %v573, 20.0
    %v614 = vmul.f32 %v570, %v606
    %v615 = vmul.f32 %v571, %v607
    %v616 = vmul.f32 %v572, %v608
    %v617 = vmul.f32 %v573, %v609
    %v618 = vsel %vm610, %v570, %v614
    %v619 = vsel %vm611, %v571, %v615
    %v620 = vsel %vm612, %v572, %v616
    %v621 = vsel %vm613, %v573, %v617
    %v622 = vld [vmem:[%s7] sm:$0x1]
    %v623 = vld [vmem:[#allocation2] sm:$0x1]
    %625 = vset.pattern.permute.xlu0 0
    %626 = vperm.xlu0 %625, %v623
    %v627 = vpop.permute.xlu0 %626
    %v629 = vperm.slane %v627, 0
    %v631 = vsel %vm185, %v622, 0
    %633 = vmatpush.msra.mxu0 0.0
    %634 = vmatpush.msra.mxu0 0.0
    %635 = vmatpush.msra.mxu0 0.0
    %636 = vmatpush.msra.mxu0 0.0
    %637 = vmatpush.msra.mxu0 0.0
    %638 = vmatpush.msra.mxu0 0.0
    %639 = vmatpush.msra.mxu0 0.0
    %640 = vmatpush.msra.mxu0 0.0
    %641 = vmatpush.msra.mxu0 0.0
    %642 = vmatpush.msra.mxu0 0.0
    %643 = vmatpush.msra.mxu0 0.0
    %644 = vmatpush.msra.mxu0 0.0
    %645 = vmatpush.msra.mxu0 %v621
    %646 = vmatpush.msra.mxu0 %v620
    %647 = vmatpush.msra.mxu0 %v619
    %648 = vmatpush.msra.mxu0 %v618
    %649 = vmatmul.f32.gmra.mxu0 %v631
    %v650 = vpop.f32.mrf.mxu0
    %v651 = vadd.f32 %v629, %v650
    %652 = vdwg.mxu0
    %vm653 = vcmask 57344
    %654 = vst.msk [vmem:[#allocation3] sm:$0x1] %vm653, %v651
    // Predicated region
    $region38: #{tpu_custom_call.1} parent=1 // pred_check
      _
    $region39: #{tpu_custom_call.1} parent=1 // pred_check_branch
      %656 = sbr.rel (0) target = $region41
    $region40: #{tpu_custom_call.1} parent=1 // pred_region
      %658 = vsyncadd [#allocation4], 0
      %s660 = sshll.u32 [#allocation3], 4
      %s661 = int_to_ptr.vmem [resolvable:$true] %s660
      %s662 = sshll.u32 %s9, 4
      %s663 = int_to_ptr.hbm [resolvable:$true] %s662
      %665 = dma.vmem_to_hbm [thread:$0]  %s661, 16, %s663, [#allocation4]
    $region41: #{tpu_custom_call.1} parent=1 // pred_fallthru
      _
    // Predicated region
    $region42: #{tpu_custom_call.1} parent=1 // pred_check
      _
    $region43: #{tpu_custom_call.1} parent=1 // pred_check_branch
      %667 = sbr.rel (0) target = $region45
    $region44: #{tpu_custom_call.1} parent=1 // pred_region
      %669 = dma.done [#allocation4], 16
    $region45: #{tpu_custom_call.1} parent=1 // pred_fallthru
      _
    %670 = vsyncpa [#allocation4], 1

</llo_original>
